<compile_context>
chip_gen: v7x
topology: tpu7x:2x2x1
jax: 0.10.0
libtpu: 0.0.40
codegen_flags: <defaults>
</compile_context>

<pallas_src>
import functools

import jax
import jax.numpy as jnp
from jax.experimental import pallas as pl
from jax.experimental.pallas import tpu as pltpu

HIDDEN_LAYERS = [(128, 0.4), (96, 0.4), (64, 0.3), (32, 0.3), (16, 0.0)]
INPUT_SIZE = 8
OUTPUT_SIZE = 1

# Max batch columns (lanes) per grid step.  Batch is the lane axis in the
# transposed layout, so tiles are multiples of 128.
TILE_B = 1024


def _round_up(n, m):
    return -(-n // m) * m


def _choose_tiling(batch, max_tile_b=TILE_B):
    """Return (tile_b, b_padded, num_tiles).

    Batch lives on the lane axis -> tile_b is a multiple of 128.  Small batches
    get a single shape-matched tile; large batches get tiles of up to
    max_tile_b with an even tile count preferred (2-TC balance on v7x)."""
    b128 = _round_up(max(batch, 1), 128)
    if b128 <= max_tile_b:
        return b128, b128, 1
    tile_b = max_tile_b
    num_tiles = -(-b128 // tile_b)
    if num_tiles % 2:  # prefer an even number of tiles for v7x's two TCs
        tile_b = _round_up(-(-b128 // (num_tiles + 1)), 128)
        num_tiles = -(-b128 // tile_b)
    return tile_b, num_tiles * tile_b, num_tiles


def _mlp_kernel(x_ref,
                w0, b0, w1, b1, w2, b2, w3, b3, w4, b4, w5, b5,
                out_ref):
    """One batch tile in transposed layout.

    x_ref:  [INPUT_SIZE, tile_b] bf16 (batch on lanes).
    wN:     [out, in] bf16 (PyTorch-native), bN: [out, 1] f32.
    w5:     [16, 1] f32 (final layer as a column), b5: [1, 1] f32.
    out_ref:[1, tile_b] f32 (lane-dense sigmoid probabilities).
    """
    h = x_ref[...]                                              # [8, tile_b] bf16

    # Hidden layers: h = ReLU(W @ h + b); dropout is identity at inference.
    for w_ref, b_ref in ((w0, b0), (w1, b1), (w2, b2), (w3, b3), (w4, b4)):
        acc = jnp.dot(w_ref[...], h.astype(jnp.bfloat16),
                      preferred_element_type=jnp.float32)       # [out, tile_b] f32
        acc = acc + b_ref[...]                                  # lane-broadcast bias
        h = jnp.maximum(acc, 0.0)                               # f32 ReLU

    # Output layer (16 -> 1): VPU broadcast-mul + sublane reduce, no M=1 MXU dot.
    logits = jnp.sum(w5[...] * h, axis=0, keepdims=True) + b5[...]   # [1, tile_b]
    out_ref[...] = jax.nn.sigmoid(logits)                       # lane-dense store


def race_predictor_forward(x, params, *, max_tile_b=TILE_B):
    """x: [B, INPUT_SIZE] f32.
    params: list of (W [out, in], b [out]) in PyTorch-native layout.
    Returns sigmoid probabilities, shape [B] (scalar if B == 1, like .squeeze())."""
    batch = x.shape[0]
    tile_b, b_padded, num_tiles = _choose_tiling(batch, max_tile_b)

    # Transposed, bf16, lane-dense input: [INPUT_SIZE, b_padded].
    xt = x.T.astype(jnp.bfloat16)
    if b_padded != batch:
        xt = jnp.pad(xt, ((0, 0), (0, b_padded - batch)))

    # Kernel-ready parameter layout.
    flat_params = []
    for w, b in params[:-1]:                       # hidden layers
        flat_params.append(w.astype(jnp.bfloat16))                 # [out, in] bf16
        flat_params.append(b.reshape(-1, 1).astype(jnp.float32))   # [out, 1]  f32
    w_last, b_last = params[-1]                    # final layer (1, 16) / (1,)
    flat_params.append(w_last.T.astype(jnp.float32))               # [16, 1] f32 (VPU)
    flat_params.append(b_last.reshape(1, 1).astype(jnp.float32))   # [1, 1]  f32

    # x/out revolve with the batch grid; weights/biases are full blocks with
    # constant index_maps -> copied to VMEM once, resident across all steps.
    x_spec = pl.BlockSpec((INPUT_SIZE, tile_b), lambda i: (0, i))
    param_specs = [pl.BlockSpec(p.shape, lambda i: (0, 0)) for p in flat_params]
    out_spec = pl.BlockSpec((1, tile_b), lambda i: (0, i))

    layer_macs = (INPUT_SIZE * 128 + 128 * 96 + 96 * 64 + 64 * 32
                  + 32 * 16 + 16 * OUTPUT_SIZE)
    bytes_accessed = (xt.size * xt.dtype.itemsize
                      + sum(int(p.size) * p.dtype.itemsize for p in flat_params)
                      + b_padded * 4)

    out = pl.pallas_call(
        _mlp_kernel,
        out_shape=jax.ShapeDtypeStruct((1, b_padded), jnp.float32),
        grid=(num_tiles,),
        in_specs=[x_spec] + param_specs,
        out_specs=out_spec,
        compiler_params=pltpu.CompilerParams(
            dimension_semantics=("parallel",)),
        cost_estimate=pl.CostEstimate(
            flops=2 * b_padded * layer_macs,
            transcendentals=b_padded,
            bytes_accessed=int(bytes_accessed)),
    )(xt, *flat_params)

    # [1, b_padded] -> [B]; squeeze matches PyTorch `.squeeze()` (scalar if B==1).
    return jnp.squeeze(out[0, :batch])


def init_params(key):
    """Deterministic init matching RacePredictor's nn.Linear layers.

    Every layer is stored PyTorch-native: W [out, in], b [out]."""
    sizes = [INPUT_SIZE] + [n for n, _ in HIDDEN_LAYERS] + [OUTPUT_SIZE]
    params = []
    for i in range(len(sizes) - 1):
        fan_in, fan_out = sizes[i], sizes[i + 1]
        key, wk, bk = jax.random.split(key, 3)
        bound = 1.0 / jnp.sqrt(fan_in)
        w = jax.random.uniform(wk, (fan_out, fan_in), jnp.float32, -bound, bound)
        b = jax.random.uniform(bk, (fan_out,), jnp.float32, -bound, bound)
        params.append((w, b))
    return params


def _reference_forward(x, params):
    """Pure-jnp f32 reference (params in PyTorch-native layout)."""
    h = x
    for w, b in params[:-1]:
        h = jnp.maximum(h @ w.T + b, 0.0)
    w_last, b_last = params[-1]
    logits = h @ w_last.T + b_last               # [B, 1]
    return jnp.squeeze(jax.nn.sigmoid(logits))


if __name__ == "__main__":
    key = jax.random.PRNGKey(0)
    pkey, xkey, xkey2 = jax.random.split(key, 3)

    params = init_params(pkey)
    fwd = jax.jit(functools.partial(race_predictor_forward, params=params))

    # Small demo batch.
    batch = 8
    x = jax.random.normal(xkey, (batch, INPUT_SIZE), jnp.float32)
    y = fwd(x)
    jax.block_until_ready(y)
    assert y.shape == (batch,), y.shape
    assert bool(jnp.all((y >= 0.0) & (y <= 1.0)))
    y_ref = _reference_forward(x, params)
    assert bool(jnp.allclose(y, y_ref, atol=5e-2)), (y, y_ref)

    # Non-multiple-of-128 batch exercises lane padding + slicing.
    batch2 = 200
    x2 = jax.random.normal(xkey2, (batch2, INPUT_SIZE), jnp.float32)
    y2 = fwd(x2)
    jax.block_until_ready(y2)
    assert y2.shape == (batch2,), y2.shape
    y2_ref = _reference_forward(x2, params)
    assert bool(jnp.allclose(y2, y2_ref, atol=5e-2)), (y2, y2_ref)

    print("KERNEL_OK")
</pallas_src>

<mosaic_0001>
module attributes {stable_mosaic.version = 11 : i64} {
  func.func @_mlp_kernel(%arg0: i32, %arg1: memref<8x128xbf16, #tpu.memory_space<vmem>>, %arg2: memref<128x8xbf16, #tpu.memory_space<vmem>>, %arg3: memref<128x1xf32, #tpu.memory_space<vmem>>, %arg4: memref<96x128xbf16, #tpu.memory_space<vmem>>, %arg5: memref<96x1xf32, #tpu.memory_space<vmem>>, %arg6: memref<64x96xbf16, #tpu.memory_space<vmem>>, %arg7: memref<64x1xf32, #tpu.memory_space<vmem>>, %arg8: memref<32x64xbf16, #tpu.memory_space<vmem>>, %arg9: memref<32x1xf32, #tpu.memory_space<vmem>>, %arg10: memref<16x32xbf16, #tpu.memory_space<vmem>>, %arg11: memref<16x1xf32, #tpu.memory_space<vmem>>, %arg12: memref<16x1xf32, #tpu.memory_space<vmem>>, %arg13: memref<1x1xf32, #tpu.memory_space<vmem>>, %arg14: memref<1x128xf32, #tpu.memory_space<vmem>>) attributes {dimension_semantics = [#tpu.dimension_semantics<parallel>], iteration_bounds = array<i64: 1>, scalar_prefetch = 0 : i64, scratch_operands = 0 : i64, tpu.core_type = #tpu.core_type<tc>, window_params = [{transform_indices = @transform_0, window_bounds = array<i64: 8, 128>}, {pipeline_mode = #tpu.pipeline_mode<synchronous>, transform_indices = @transform_1, window_bounds = array<i64: 128, 8>}, {pipeline_mode = #tpu.pipeline_mode<synchronous>, transform_indices = @transform_2, window_bounds = array<i64: 128, 1>}, {pipeline_mode = #tpu.pipeline_mode<synchronous>, transform_indices = @transform_3, window_bounds = array<i64: 96, 128>}, {pipeline_mode = #tpu.pipeline_mode<synchronous>, transform_indices = @transform_4, window_bounds = array<i64: 96, 1>}, {pipeline_mode = #tpu.pipeline_mode<synchronous>, transform_indices = @transform_5, window_bounds = array<i64: 64, 96>}, {pipeline_mode = #tpu.pipeline_mode<synchronous>, transform_indices = @transform_6, window_bounds = array<i64: 64, 1>}, {pipeline_mode = #tpu.pipeline_mode<synchronous>, transform_indices = @transform_7, window_bounds = array<i64: 32, 64>}, {pipeline_mode = #tpu.pipeline_mode<synchronous>, transform_indices = @transform_8, window_bounds = array<i64: 32, 1>}, {pipeline_mode = #tpu.pipeline_mode<synchronous>, transform_indices = @transform_9, window_bounds = array<i64: 16, 32>}, {pipeline_mode = #tpu.pipeline_mode<synchronous>, transform_indices = @transform_10, window_bounds = array<i64: 16, 1>}, {pipeline_mode = #tpu.pipeline_mode<synchronous>, transform_indices = @transform_11, window_bounds = array<i64: 16, 1>}, {pipeline_mode = #tpu.pipeline_mode<synchronous>, transform_indices = @transform_12, window_bounds = array<i64: 1, 1>}, {transform_indices = @transform_13, window_bounds = array<i64: 1, 128>}]} {
    %c0 = arith.constant 0 : index
    %c0_0 = arith.constant 0 : index
    %0 = vector.load %arg1[%c0, %c0_0] : memref<8x128xbf16, #tpu.memory_space<vmem>>, vector<8x128xbf16>
    %c0_1 = arith.constant 0 : index
    %c0_2 = arith.constant 0 : index
    %1 = vector.load %arg2[%c0_1, %c0_2] : memref<128x8xbf16, #tpu.memory_space<vmem>>, vector<128x8xbf16>
    %cst = arith.constant dense<0.000000e+00> : vector<128x128xf32>
    %2 = tpu.matmul %1, %0, %cst {dimension_numbers = #tpu.dot_dimension_numbers<[1], [0], [0], [1], [0, 0, 1, 1], [], []>} : vector<128x8xbf16>, vector<8x128xbf16>, vector<128x128xf32> -> vector<128x128xf32>
    %c0_3 = arith.constant 0 : index
    %c0_4 = arith.constant 0 : index
    %3 = vector.load %arg3[%c0_3, %c0_4] : memref<128x1xf32, #tpu.memory_space<vmem>>, vector<128x1xf32>
    %4 = vector.broadcast %3 : vector<128x1xf32> to vector<128x128xf32>
    %5 = arith.addf %2, %4 : vector<128x128xf32>
    %cst_5 = arith.constant 0.000000e+00 : f32
    %6 = vector.broadcast %cst_5 : f32 to vector<128x128xf32>
    %7 = arith.maximumf %5, %6 : vector<128x128xf32>
    %c0_6 = arith.constant 0 : index
    %c0_7 = arith.constant 0 : index
    %8 = vector.load %arg4[%c0_6, %c0_7] : memref<96x128xbf16, #tpu.memory_space<vmem>>, vector<96x128xbf16>
    %9 = arith.truncf %7 : vector<128x128xf32> to vector<128x128xbf16>
    %cst_8 = arith.constant dense<0.000000e+00> : vector<96x128xf32>
    %10 = tpu.matmul %8, %9, %cst_8 {dimension_numbers = #tpu.dot_dimension_numbers<[1], [0], [0], [1], [0, 0, 1, 1], [], []>} : vector<96x128xbf16>, vector<128x128xbf16>, vector<96x128xf32> -> vector<96x128xf32>
    %c0_9 = arith.constant 0 : index
    %c0_10 = arith.constant 0 : index
    %11 = vector.load %arg5[%c0_9, %c0_10] : memref<96x1xf32, #tpu.memory_space<vmem>>, vector<96x1xf32>
    %12 = vector.broadcast %11 : vector<96x1xf32> to vector<96x128xf32>
    %13 = arith.addf %10, %12 : vector<96x128xf32>
    %cst_11 = arith.constant 0.000000e+00 : f32
    %14 = vector.broadcast %cst_11 : f32 to vector<96x128xf32>
    %15 = arith.maximumf %13, %14 : vector<96x128xf32>
    %c0_12 = arith.constant 0 : index
    %c0_13 = arith.constant 0 : index
    %16 = vector.load %arg6[%c0_12, %c0_13] : memref<64x96xbf16, #tpu.memory_space<vmem>>, vector<64x96xbf16>
    %17 = arith.truncf %15 : vector<96x128xf32> to vector<96x128xbf16>
    %cst_14 = arith.constant dense<0.000000e+00> : vector<64x128xf32>
    %18 = tpu.matmul %16, %17, %cst_14 {dimension_numbers = #tpu.dot_dimension_numbers<[1], [0], [0], [1], [0, 0, 1, 1], [], []>} : vector<64x96xbf16>, vector<96x128xbf16>, vector<64x128xf32> -> vector<64x128xf32>
    %c0_15 = arith.constant 0 : index
    %c0_16 = arith.constant 0 : index
    %19 = vector.load %arg7[%c0_15, %c0_16] : memref<64x1xf32, #tpu.memory_space<vmem>>, vector<64x1xf32>
    %20 = vector.broadcast %19 : vector<64x1xf32> to vector<64x128xf32>
    %21 = arith.addf %18, %20 : vector<64x128xf32>
    %cst_17 = arith.constant 0.000000e+00 : f32
    %22 = vector.broadcast %cst_17 : f32 to vector<64x128xf32>
    %23 = arith.maximumf %21, %22 : vector<64x128xf32>
    %c0_18 = arith.constant 0 : index
    %c0_19 = arith.constant 0 : index
    %24 = vector.load %arg8[%c0_18, %c0_19] : memref<32x64xbf16, #tpu.memory_space<vmem>>, vector<32x64xbf16>
    %25 = arith.truncf %23 : vector<64x128xf32> to vector<64x128xbf16>
    %cst_20 = arith.constant dense<0.000000e+00> : vector<32x128xf32>
    %26 = tpu.matmul %24, %25, %cst_20 {dimension_numbers = #tpu.dot_dimension_numbers<[1], [0], [0], [1], [0, 0, 1, 1], [], []>} : vector<32x64xbf16>, vector<64x128xbf16>, vector<32x128xf32> -> vector<32x128xf32>
    %c0_21 = arith.constant 0 : index
    %c0_22 = arith.constant 0 : index
    %27 = vector.load %arg9[%c0_21, %c0_22] : memref<32x1xf32, #tpu.memory_space<vmem>>, vector<32x1xf32>
    %28 = vector.broadcast %27 : vector<32x1xf32> to vector<32x128xf32>
    %29 = arith.addf %26, %28 : vector<32x128xf32>
    %cst_23 = arith.constant 0.000000e+00 : f32
    %30 = vector.broadcast %cst_23 : f32 to vector<32x128xf32>
    %31 = arith.maximumf %29, %30 : vector<32x128xf32>
    %c0_24 = arith.constant 0 : index
    %c0_25 = arith.constant 0 : index
    %32 = vector.load %arg10[%c0_24, %c0_25] : memref<16x32xbf16, #tpu.memory_space<vmem>>, vector<16x32xbf16>
    %33 = arith.truncf %31 : vector<32x128xf32> to vector<32x128xbf16>
    %cst_26 = arith.constant dense<0.000000e+00> : vector<16x128xf32>
    %34 = tpu.matmul %32, %33, %cst_26 {dimension_numbers = #tpu.dot_dimension_numbers<[1], [0], [0], [1], [0, 0, 1, 1], [], []>} : vector<16x32xbf16>, vector<32x128xbf16>, vector<16x128xf32> -> vector<16x128xf32>
    %c0_27 = arith.constant 0 : index
    %c0_28 = arith.constant 0 : index
    %35 = vector.load %arg11[%c0_27, %c0_28] : memref<16x1xf32, #tpu.memory_space<vmem>>, vector<16x1xf32>
    %36 = vector.broadcast %35 : vector<16x1xf32> to vector<16x128xf32>
    %37 = arith.addf %34, %36 : vector<16x128xf32>
    %cst_29 = arith.constant 0.000000e+00 : f32
    %38 = vector.broadcast %cst_29 : f32 to vector<16x128xf32>
    %39 = arith.maximumf %37, %38 : vector<16x128xf32>
    %c0_30 = arith.constant 0 : index
    %c0_31 = arith.constant 0 : index
    %40 = vector.load %arg12[%c0_30, %c0_31] : memref<16x1xf32, #tpu.memory_space<vmem>>, vector<16x1xf32>
    %41 = vector.broadcast %40 : vector<16x1xf32> to vector<16x128xf32>
    %42 = arith.mulf %41, %39 : vector<16x128xf32>
    %cst_32 = arith.constant dense<0.000000e+00> : vector<128xf32>
    %43 = vector.multi_reduction <add>, %42, %cst_32 [0] : vector<16x128xf32> to vector<128xf32>
    %44 = vector.shape_cast %43 : vector<128xf32> to vector<1x128xf32>
    %c0_33 = arith.constant 0 : index
    %c0_34 = arith.constant 0 : index
    %45 = vector.load %arg13[%c0_33, %c0_34] : memref<1x1xf32, #tpu.memory_space<vmem>>, vector<1x1xf32>
    %46 = vector.broadcast %45 : vector<1x1xf32> to vector<1x128xf32>
    %47 = arith.addf %44, %46 : vector<1x128xf32>
    %48 = arith.negf %47 : vector<1x128xf32>
    %49 = math.exp %48 : vector<1x128xf32>
    %cst_35 = arith.constant 1.000000e+00 : f32
    %50 = vector.broadcast %cst_35 : f32 to vector<1x128xf32>
    %51 = arith.addf %50, %49 : vector<1x128xf32>
    %52 = arith.divf %50, %51 : vector<1x128xf32>
    %c0_36 = arith.constant 0 : index
    %c0_37 = arith.constant 0 : index
    %53 = vector.load %arg14[%c0_36, %c0_37] : memref<1x128xf32, #tpu.memory_space<vmem>>, vector<1x128xf32>
    tpu.vector_store %arg14[%c0_36, %c0_37], %52 {strides = array<i32>} : memref<1x128xf32, #tpu.memory_space<vmem>>, vector<1x128xf32>,
    return
  }
  func.func @transform_0(%arg0: i32) -> (i32, i32) {
    %c0_i32 = arith.constant 0 : i32
    %c0_i32_0 = arith.constant 0 : i32
    return %c0_i32, %arg0 : i32, i32
  }
  func.func @transform_1(%arg0: i32) -> (i32, i32) {
    %c0_i32 = arith.constant 0 : i32
    %c0_i32_0 = arith.constant 0 : i32
    %c0_i32_1 = arith.constant 0 : i32
    return %c0_i32, %c0_i32_0 : i32, i32
  }
  func.func @transform_2(%arg0: i32) -> (i32, i32) {
    %c0_i32 = arith.constant 0 : i32
    %c0_i32_0 = arith.constant 0 : i32
    %c0_i32_1 = arith.constant 0 : i32
    return %c0_i32, %c0_i32_0 : i32, i32
  }
  func.func @transform_3(%arg0: i32) -> (i32, i32) {
    %c0_i32 = arith.constant 0 : i32
    %c0_i32_0 = arith.constant 0 : i32
    %c0_i32_1 = arith.constant 0 : i32
    return %c0_i32, %c0_i32_0 : i32, i32
  }
  func.func @transform_4(%arg0: i32) -> (i32, i32) {
    %c0_i32 = arith.constant 0 : i32
    %c0_i32_0 = arith.constant 0 : i32
    %c0_i32_1 = arith.constant 0 : i32
    return %c0_i32, %c0_i32_0 : i32, i32
  }
  func.func @transform_5(%arg0: i32) -> (i32, i32) {
    %c0_i32 = arith.constant 0 : i32
    %c0_i32_0 = arith.constant 0 : i32
    %c0_i32_1 = arith.constant 0 : i32
    return %c0_i32, %c0_i32_0 : i32, i32
  }
  func.func @transform_6(%arg0: i32) -> (i32, i32) {
    %c0_i32 = arith.constant 0 : i32
    %c0_i32_0 = arith.constant 0 : i32
    %c0_i32_1 = arith.constant 0 : i32
    return %c0_i32, %c0_i32_0 : i32, i32
  }
  func.func @transform_7(%arg0: i32) -> (i32, i32) {
    %c0_i32 = arith.constant 0 : i32
    %c0_i32_0 = arith.constant 0 : i32
    %c0_i32_1 = arith.constant 0 : i32
    return %c0_i32, %c0_i32_0 : i32, i32
  }
  func.func @transform_8(%arg0: i32) -> (i32, i32) {
    %c0_i32 = arith.constant 0 : i32
    %c0_i32_0 = arith.constant 0 : i32
    %c0_i32_1 = arith.constant 0 : i32
    return %c0_i32, %c0_i32_0 : i32, i32
  }
  func.func @transform_9(%arg0: i32) -> (i32, i32) {
    %c0_i32 = arith.constant 0 : i32
    %c0_i32_0 = arith.constant 0 : i32
    %c0_i32_1 = arith.constant 0 : i32
    return %c0_i32, %c0_i32_0 : i32, i32
  }
  func.func @transform_10(%arg0: i32) -> (i32, i32) {
    %c0_i32 = arith.constant 0 : i32
    %c0_i32_0 = arith.constant 0 : i32
    %c0_i32_1 = arith.constant 0 : i32
    return %c0_i32, %c0_i32_0 : i32, i32
  }
  func.func @transform_11(%arg0: i32) -> (i32, i32) {
    %c0_i32 = arith.constant 0 : i32
    %c0_i32_0 = arith.constant 0 : i32
    %c0_i32_1 = arith.constant 0 : i32
    return %c0_i32, %c0_i32_0 : i32, i32
  }
  func.func @transform_12(%arg0: i32) -> (i32, i32) {
    %c0_i32 = arith.constant 0 : i32
    %c0_i32_0 = arith.constant 0 : i32
    %c0_i32_1 = arith.constant 0 : i32
    return %c0_i32, %c0_i32_0 : i32, i32
  }
  func.func @transform_13(%arg0: i32) -> (i32, i32) {
    %c0_i32 = arith.constant 0 : i32
    %c0_i32_0 = arith.constant 0 : i32
    return %c0_i32, %arg0 : i32, i32
  }
}

</mosaic_0001>

<llo_original>
// kernel: race_predictor_forward.1
$region0: #{race_predictor_forward.1}
  #allocation0 [shape = 'u32[]', space=smem, size = 0x4, offset = 0x4, fixed_abs, tag = 'smem constant byte address 0x4 - core index']
  #allocation1 [shape = 'u32[144,128]{1,0:T(1,128)}', space=vmem, size = 0x12000, scoped, tag = 'internal scratch']
  #allocation2 [shape = 'f32[1,1]{1,0:T(1,128)S(1)}', space=vmem, size = 0x200, scoped, tag = 'scoped memory for race_predictor_forward.1']
  %s0 = inlined_call_operand.vmem [shape: bf16[8,128], index: 0, kind: input, shape index: {}]
  %s1 = inlined_call_operand.vmem [shape: bf16[128,8], index: 1, kind: input, shape index: {}]
  %s2 = inlined_call_operand.hbm [shape: f32[128,1], index: 2, kind: input, shape index: {}]
  %s3 = inlined_call_operand.hbm [shape: bf16[96,128], index: 3, kind: input, shape index: {}]
  %s4 = inlined_call_operand.hbm [shape: f32[96,1], index: 4, kind: input, shape index: {}]
  %s5 = inlined_call_operand.hbm [shape: bf16[64,96], index: 5, kind: input, shape index: {}]
  %s6 = inlined_call_operand.hbm [shape: f32[64,1], index: 6, kind: input, shape index: {}]
  %s7 = inlined_call_operand.vmem [shape: bf16[32,64], index: 7, kind: input, shape index: {}]
  %s8 = inlined_call_operand.hbm [shape: f32[32,1], index: 8, kind: input, shape index: {}]
  %s9 = inlined_call_operand.vmem [shape: bf16[16,32], index: 9, kind: input, shape index: {}]
  %s10 = inlined_call_operand.hbm [shape: f32[16,1], index: 10, kind: input, shape index: {}]
  %s11 = inlined_call_operand.hbm [shape: f32[16,1], index: 11, kind: input, shape index: {}]
  %s12 = inlined_call_operand.<no memory space> [shape: f32[1,1], index: 12, kind: input, shape index: {}]
  %s13 = inlined_call_operand.vmem [shape: f32[1,128], index: 13, kind: output, shape index: {}]
  %s14 = sld [smem:[#allocation0]]
  $region94: #{race_predictor_forward.1} parent=0
    _
  %s16 = ssub.s32 1, %s14
  %s17 = scalar_select 0, %s16, %s14
  %v18 = vstv %s12
  %19 = vst [vmem:[#allocation2] sm:$0x1] %v18
  $region1: #{race_predictor_forward.1} parent=0
    #allocation3 [shape = 'u8[65536]{0}', space=vmem, size = 0x10000, scoped, tag = 'input window, operand 2, single buffered']
    #allocation4 [shape = 's32[1]{0}', space=sflag, size = 0x4, scoped, tag = 'scoped memory for race_predictor_forward.1']
    #allocation5 [shape = 'u8[24576]{0}', space=vmem, size = 0x6000, scoped, tag = 'input window, operand 3, single buffered']
    #allocation6 [shape = 's32[1]{0}', space=sflag, size = 0x4, scoped, tag = 'scoped memory for race_predictor_forward.1']
    #allocation7 [shape = 'u8[49152]{0}', space=vmem, size = 0xc000, scoped, tag = 'input window, operand 4, single buffered']
    #allocation8 [shape = 'u8[16384]{0}', space=vmem, size = 0x4000, scoped, tag = 'input window, operand 5, single buffered']
    #allocation9 [shape = 's32[1]{0}', space=sflag, size = 0x4, scoped, tag = 'scoped memory for race_predictor_forward.1']
    #allocation10 [shape = 'u8[32768]{0}', space=vmem, size = 0x8000, scoped, tag = 'input window, operand 6, single buffered']
    #allocation11 [shape = 'u8[16384]{0}', space=vmem, size = 0x4000, scoped, tag = 'input window, operand 8, single buffered']
    #allocation12 [shape = 's32[1]{0}', space=sflag, size = 0x4, scoped, tag = 'scoped memory for race_predictor_forward.1']
    #allocation13 [shape = 'u8[8192]{0}', space=vmem, size = 0x2000, scoped, tag = 'input window, operand 10, single buffered']
    #allocation14 [shape = 'u8[8192]{0}', space=vmem, size = 0x2000, scoped, tag = 'input window, operand 11, single buffered']
    #allocation15 [shape = 's32[1]{0}', space=sflag, size = 0x4, scoped, tag = 'scoped memory for race_predictor_forward.1']
    %20 = vsyncpa [#allocation4], 0
    %21 = vsyncpa [#allocation6], 0
    %22 = vsyncpa [#allocation9], 0
    %23 = vsyncpa [#allocation12], 0
    %24 = vsyncpa [#allocation15], 0
    // Predicated region
    $region2: #{race_predictor_forward.1} parent=1 // pred_check
      _
    $region3: #{race_predictor_forward.1} parent=1 // pred_check_branch
      %26 = sbr.rel (0) target = $region5
    $region4: #{race_predictor_forward.1} parent=1 // pred_region
      _
    $region5: #{race_predictor_forward.1} parent=1 // pred_fallthru
      _
    // Predicated region
    $region6: #{race_predictor_forward.1} parent=1 // pred_check
      _
    $region7: #{race_predictor_forward.1} parent=1 // pred_check_branch
      %28 = sbr.rel (0) target = $region9
    $region8: #{race_predictor_forward.1} parent=1 // pred_region
      _
    $region9: #{race_predictor_forward.1} parent=1 // pred_fallthru
      _
    // Predicated region
    $region10: #{race_predictor_forward.1} parent=1 // pred_check
      _
    $region11: #{race_predictor_forward.1} parent=1 // pred_check_branch
      %30 = sbr.rel (0) target = $region13
    $region12: #{race_predictor_forward.1} parent=1 // pred_region
      %s32 = ssub.s32 2048, 2048
      %33 = vsyncadd [#allocation4], %s32
      %s34 = sshll.u32 [#allocation3], 4
      %s35 = int_to_ptr.vmem [resolvable:$true] %s34
      %40 = dma.hbm_to_vmem [thread:$0]  %s2, 2048, %s35, [#allocation4], 128, 128, 8
    $region13: #{race_predictor_forward.1} parent=1 // pred_fallthru
      _
    // Predicated region
    $region14: #{race_predictor_forward.1} parent=1 // pred_check
      _
    $region15: #{race_predictor_forward.1} parent=1 // pred_check_branch
      %42 = sbr.rel (0) target = $region17
    $region16: #{race_predictor_forward.1} parent=1 // pred_region
      %s44 = ssub.s32 768, 768
      %45 = vsyncadd [#allocation6], %s44
      %s46 = sshll.u32 [#allocation5], 4
      %s47 = int_to_ptr.vmem [resolvable:$true] %s46
      %52 = dma.hbm_to_vmem [thread:$0]  %s3, 768, %s47, [#allocation6], 64, 64, 4
    $region17: #{race_predictor_forward.1} parent=1 // pred_fallthru
      _
    // Predicated region
    $region18: #{race_predictor_forward.1} parent=1 // pred_check
      _
    $region19: #{race_predictor_forward.1} parent=1 // pred_check_branch
      %54 = sbr.rel (0) target = $region21
    $region20: #{race_predictor_forward.1} parent=1 // pred_region
      %s56 = ssub.s32 1536, 1536
      %57 = vsyncadd [#allocation6], %s56
      %s58 = sshll.u32 [#allocation7], 4
      %s59 = int_to_ptr.vmem [resolvable:$true] %s58
      %64 = dma.hbm_to_vmem [thread:$0]  %s4, 1536, %s59, [#allocation6], 128, 128, 8
    $region21: #{race_predictor_forward.1} parent=1 // pred_fallthru
      _
    // Predicated region
    $region22: #{race_predictor_forward.1} parent=1 // pred_check
      _
    $region23: #{race_predictor_forward.1} parent=1 // pred_check_branch
      %66 = sbr.rel (0) target = $region25
    $region24: #{race_predictor_forward.1} parent=1 // pred_region
      %s68 = ssub.s32 512, 512
      %69 = vsyncadd [#allocation9], %s68
      %s70 = sshll.u32 [#allocation8], 4
      %s71 = int_to_ptr.vmem [resolvable:$true] %s70
      %76 = dma.hbm_to_vmem [thread:$0]  %s5, 512, %s71, [#allocation9], 64, 64, 4
    $region25: #{race_predictor_forward.1} parent=1 // pred_fallthru
      _
    // Predicated region
    $region26: #{race_predictor_forward.1} parent=1 // pred_check
      _
    $region27: #{race_predictor_forward.1} parent=1 // pred_check_branch
      %78 = sbr.rel (0) target = $region29
    $region28: #{race_predictor_forward.1} parent=1 // pred_region
      %s80 = ssub.s32 1024, 1024
      %81 = vsyncadd [#allocation9], %s80
      %s82 = sshll.u32 [#allocation10], 4
      %s83 = int_to_ptr.vmem [resolvable:$true] %s82
      %88 = dma.hbm_to_vmem [thread:$0]  %s6, 1024, %s83, [#allocation9], 128, 128, 8
    $region29: #{race_predictor_forward.1} parent=1 // pred_fallthru
      _
    // Predicated region
    $region30: #{race_predictor_forward.1} parent=1 // pred_check
      _
    $region31: #{race_predictor_forward.1} parent=1 // pred_check_branch
      %90 = sbr.rel (0) target = $region33
    $region32: #{race_predictor_forward.1} parent=1 // pred_region
      _
    $region33: #{race_predictor_forward.1} parent=1 // pred_fallthru
      _
    // Predicated region
    $region34: #{race_predictor_forward.1} parent=1 // pred_check
      _
    $region35: #{race_predictor_forward.1} parent=1 // pred_check_branch
      %92 = sbr.rel (0) target = $region37
    $region36: #{race_predictor_forward.1} parent=1 // pred_region
      %s94 = ssub.s32 512, 512
      %95 = vsyncadd [#allocation12], %s94
      %s96 = sshll.u32 [#allocation11], 4
      %s97 = int_to_ptr.vmem [resolvable:$true] %s96
      %102 = dma.hbm_to_vmem [thread:$0]  %s8, 512, %s97, [#allocation12], 128, 128, 8
    $region37: #{race_predictor_forward.1} parent=1 // pred_fallthru
      _
    // Predicated region
    $region38: #{race_predictor_forward.1} parent=1 // pred_check
      _
    $region39: #{race_predictor_forward.1} parent=1 // pred_check_branch
      %104 = sbr.rel (0) target = $region41
    $region40: #{race_predictor_forward.1} parent=1 // pred_region
      _
    $region41: #{race_predictor_forward.1} parent=1 // pred_fallthru
      _
    // Predicated region
    $region42: #{race_predictor_forward.1} parent=1 // pred_check
      _
    $region43: #{race_predictor_forward.1} parent=1 // pred_check_branch
      %106 = sbr.rel (0) target = $region45
    $region44: #{race_predictor_forward.1} parent=1 // pred_region
      %s108 = ssub.s32 256, 256
      %109 = vsyncadd [#allocation12], %s108
      %s110 = sshll.u32 [#allocation13], 4
      %s111 = int_to_ptr.vmem [resolvable:$true] %s110
      %116 = dma.hbm_to_vmem [thread:$0]  %s10, 256, %s111, [#allocation12], 128, 128, 8
    $region45: #{race_predictor_forward.1} parent=1 // pred_fallthru
      _
    // Predicated region
    $region46: #{race_predictor_forward.1} parent=1 // pred_check
      _
    $region47: #{race_predictor_forward.1} parent=1 // pred_check_branch
      %118 = sbr.rel (0) target = $region49
    $region48: #{race_predictor_forward.1} parent=1 // pred_region
      %s120 = ssub.s32 256, 256
      %121 = vsyncadd [#allocation15], %s120
      %s122 = sshll.u32 [#allocation14], 4
      %s123 = int_to_ptr.vmem [resolvable:$true] %s122
      %128 = dma.hbm_to_vmem [thread:$0]  %s11, 256, %s123, [#allocation15], 128, 128, 8
    $region49: #{race_predictor_forward.1} parent=1 // pred_fallthru
      _
    // Predicated region
    $region50: #{race_predictor_forward.1} parent=1 // pred_check
      _
    $region51: #{race_predictor_forward.1} parent=1 // pred_check_branch
      %130 = sbr.rel (0) target = $region53
    $region52: #{race_predictor_forward.1} parent=1 // pred_region
      _
    $region53: #{race_predictor_forward.1} parent=1 // pred_fallthru
      _
    // Predicated region
    $region54: #{race_predictor_forward.1} parent=1 // pred_check
      _
    $region55: #{race_predictor_forward.1} parent=1 // pred_check_branch
      %132 = sbr.rel (0) target = $region57
    $region56: #{race_predictor_forward.1} parent=1 // pred_region
      %133 = dma.done [#allocation4], 2048
    $region57: #{race_predictor_forward.1} parent=1 // pred_fallthru
      _
    // Predicated region
    $region58: #{race_predictor_forward.1} parent=1 // pred_check
      _
    $region59: #{race_predictor_forward.1} parent=1 // pred_check_branch
      %135 = sbr.rel (0) target = $region61
    $region60: #{race_predictor_forward.1} parent=1 // pred_region
      %136 = dma.done [#allocation6], 768
    $region61: #{race_predictor_forward.1} parent=1 // pred_fallthru
      _
    // Predicated region
    $region62: #{race_predictor_forward.1} parent=1 // pred_check
      _
    $region63: #{race_predictor_forward.1} parent=1 // pred_check_branch
      %138 = sbr.rel (0) target = $region65
    $region64: #{race_predictor_forward.1} parent=1 // pred_region
      %139 = dma.done [#allocation6], 1536
    $region65: #{race_predictor_forward.1} parent=1 // pred_fallthru
      _
    // Predicated region
    $region66: #{race_predictor_forward.1} parent=1 // pred_check
      _
    $region67: #{race_predictor_forward.1} parent=1 // pred_check_branch
      %141 = sbr.rel (0) target = $region69
    $region68: #{race_predictor_forward.1} parent=1 // pred_region
      %142 = dma.done [#allocation9], 512
    $region69: #{race_predictor_forward.1} parent=1 // pred_fallthru
      _
    // Predicated region
    $region70: #{race_predictor_forward.1} parent=1 // pred_check
      _
    $region71: #{race_predictor_forward.1} parent=1 // pred_check_branch
      %144 = sbr.rel (0) target = $region73
    $region72: #{race_predictor_forward.1} parent=1 // pred_region
      %145 = dma.done [#allocation9], 1024
    $region73: #{race_predictor_forward.1} parent=1 // pred_fallthru
      _
    // Predicated region
    $region74: #{race_predictor_forward.1} parent=1 // pred_check
      _
    $region75: #{race_predictor_forward.1} parent=1 // pred_check_branch
      %147 = sbr.rel (0) target = $region77
    $region76: #{race_predictor_forward.1} parent=1 // pred_region
      %148 = dma.done [#allocation12], 512
    $region77: #{race_predictor_forward.1} parent=1 // pred_fallthru
      _
    // Predicated region
    $region78: #{race_predictor_forward.1} parent=1 // pred_check
      _
    $region79: #{race_predictor_forward.1} parent=1 // pred_check_branch
      %150 = sbr.rel (0) target = $region81
    $region80: #{race_predictor_forward.1} parent=1 // pred_region
      %151 = dma.done [#allocation12], 256
    $region81: #{race_predictor_forward.1} parent=1 // pred_fallthru
      _
    // Predicated region
    $region82: #{race_predictor_forward.1} parent=1 // pred_check
      _
    $region83: #{race_predictor_forward.1} parent=1 // pred_check_branch
      %153 = sbr.rel (0) target = $region85
    $region84: #{race_predictor_forward.1} parent=1 // pred_region
      %154 = dma.done [#allocation15], 256
    $region85: #{race_predictor_forward.1} parent=1 // pred_fallthru
      _
    %v156 = vld [vmem:[%s0] sm:$0xf]
    %v157 = vld [vmem:[%s1] sm:$0xf]
    %v158 = vld [vmem:[%s1 + $0x4] sm:$0xf]
    %v159 = vld [vmem:[%s1 + $0x8] sm:$0xf]
    %v160 = vld [vmem:[%s1 + $0xc] sm:$0xf]
    %v161 = vld [vmem:[%s1 + $0x10] sm:$0xf]
    %v162 = vld [vmem:[%s1 + $0x14] sm:$0xf]
    %v163 = vld [vmem:[%s1 + $0x18] sm:$0xf]
    %v164 = vld [vmem:[%s1 + $0x1c] sm:$0xf]
    %v165 = vld [vmem:[%s1 + $0x20] sm:$0xf]
    %v166 = vld [vmem:[%s1 + $0x24] sm:$0xf]
    %v167 = vld [vmem:[%s1 + $0x28] sm:$0xf]
    %v168 = vld [vmem:[%s1 + $0x2c] sm:$0xf]
    %v169 = vld [vmem:[%s1 + $0x30] sm:$0xf]
    %v170 = vld [vmem:[%s1 + $0x34] sm:$0xf]
    %v171 = vld [vmem:[%s1 + $0x38] sm:$0xf]
    %v172 = vld [vmem:[%s1 + $0x3c] sm:$0xf]
    %v173 = vld [vmem:[#allocation3] sm:$0xff]
    %v174 = vld [vmem:[#allocation3 + $0x8] sm:$0xff]
    %v175 = vld [vmem:[#allocation3 + $0x10] sm:$0xff]
    %v176 = vld [vmem:[#allocation3 + $0x18] sm:$0xff]
    %v177 = vld [vmem:[#allocation3 + $0x20] sm:$0xff]
    %v178 = vld [vmem:[#allocation3 + $0x28] sm:$0xff]
    %v179 = vld [vmem:[#allocation3 + $0x30] sm:$0xff]
    %v180 = vld [vmem:[#allocation3 + $0x38] sm:$0xff]
    %v181 = vld [vmem:[#allocation3 + $0x40] sm:$0xff]
    %v182 = vld [vmem:[#allocation3 + $0x48] sm:$0xff]
    %v183 = vld [vmem:[#allocation3 + $0x50] sm:$0xff]
    %v184 = vld [vmem:[#allocation3 + $0x58] sm:$0xff]
    %v185 = vld [vmem:[#allocation3 + $0x60] sm:$0xff]
    %v186 = vld [vmem:[#allocation3 + $0x68] sm:$0xff]
    %v187 = vld [vmem:[#allocation3 + $0x70] sm:$0xff]
    %v188 = vld [vmem:[#allocation3 + $0x78] sm:$0xff]
    %190 = vset.pattern.permute.xlu0 0
    %191 = vperm.xlu0 %190, %v173
    %v192 = vpop.permute.xlu0 %191
    %195 = vset.pattern.permute.xlu0 0
    %196 = vperm.xlu0 %195, %v174
    %v197 = vpop.permute.xlu0 %196
    %200 = vset.pattern.permute.xlu0 0
    %201 = vperm.xlu0 %200, %v175
    %v202 = vpop.permute.xlu0 %201
    %205 = vset.pattern.permute.xlu0 0
    %206 = vperm.xlu0 %205, %v176
    %v207 = vpop.permute.xlu0 %206
    %210 = vset.pattern.permute.xlu0 0
    %211 = vperm.xlu0 %210, %v177
    %v212 = vpop.permute.xlu0 %211
    %215 = vset.pattern.permute.xlu0 0
    %216 = vperm.xlu0 %215, %v178
    %v217 = vpop.permute.xlu0 %216
    %220 = vset.pattern.permute.xlu0 0
    %221 = vperm.xlu0 %220, %v179
    %v222 = vpop.permute.xlu0 %221
    %225 = vset.pattern.permute.xlu0 0
    %226 = vperm.xlu0 %225, %v180
    %v227 = vpop.permute.xlu0 %226
    %230 = vset.pattern.permute.xlu0 0
    %231 = vperm.xlu0 %230, %v181
    %v232 = vpop.permute.xlu0 %231
    %235 = vset.pattern.permute.xlu0 0
    %236 = vperm.xlu0 %235, %v182
    %v237 = vpop.permute.xlu0 %236
    %240 = vset.pattern.permute.xlu0 0
    %241 = vperm.xlu0 %240, %v183
    %v242 = vpop.permute.xlu0 %241
    %245 = vset.pattern.permute.xlu0 0
    %246 = vperm.xlu0 %245, %v184
    %v247 = vpop.permute.xlu0 %246
    %250 = vset.pattern.permute.xlu0 0
    %251 = vperm.xlu0 %250, %v185
    %v252 = vpop.permute.xlu0 %251
    %255 = vset.pattern.permute.xlu0 0
    %256 = vperm.xlu0 %255, %v186
    %v257 = vpop.permute.xlu0 %256
    %260 = vset.pattern.permute.xlu0 0
    %261 = vperm.xlu0 %260, %v187
    %v262 = vpop.permute.xlu0 %261
    %265 = vset.pattern.permute.xlu0 0
    %266 = vperm.xlu0 %265, %v188
    %v267 = vpop.permute.xlu0 %266
    %v285 = vunpack.c.l.b16 %v157
    %v286 = vunpack.c.l.b16 %v158
    %v287 = vunpack.c.l.b16 %v159
    %v288 = vunpack.c.l.b16 %v160
    %v289 = vunpack.c.l.b16 %v161
    %v290 = vunpack.c.l.b16 %v162
    %v291 = vunpack.c.l.b16 %v163
    %v292 = vunpack.c.l.b16 %v164
    %v293 = vunpack.c.l.b16 %v165
    %v294 = vunpack.c.l.b16 %v166
    %v295 = vunpack.c.l.b16 %v167
    %v296 = vunpack.c.l.b16 %v168
    %v297 = vunpack.c.l.b16 %v169
    %v298 = vunpack.c.l.b16 %v170
    %v299 = vunpack.c.l.b16 %v171
    %v300 = vunpack.c.l.b16 %v172
    %v301 = vpack.c.b16 %v286, %v285
    %v302 = vpack.c.b16 %v288, %v287
    %v303 = vpack.c.b16 %v290, %v289
    %v304 = vpack.c.b16 %v292, %v291
    %v305 = vpack.c.b16 %v294, %v293
    %v306 = vpack.c.b16 %v296, %v295
    %v307 = vpack.c.b16 %v298, %v297
    %v308 = vpack.c.b16 %v300, %v299
    %vm309 = vcmask 64512
    %v311 = vsel %vm309, %v301, 0
    %v314 = vsel %vm309, %v302, 0
    %v317 = vsel %vm309, %v303, 0
    %v320 = vsel %vm309, %v304, 0
    %v323 = vsel %vm309, %v305, 0
    %v326 = vsel %vm309, %v306, 0
    %v329 = vsel %vm309, %v307, 0
    %v332 = vsel %vm309, %v308, 0
    %vm334 = vcmask 1043456
    %v336 = vsel %vm334, %v156, 0
    %338 = vmatprep.subr.bf16.mxu0 0
    %339 = vmatpush1.bf16.msra.mxu0 %v336
    %340 = vmatprep.subr.bf16.mxu0 0
    %341 = vmatpush1.bf16.msra.mxu0 0
    %342 = vmatprep.subr.bf16.mxu0 0
    %343 = vmatpush1.bf16.msra.mxu0 0
    %344 = vmatprep.subr.bf16.mxu0 0
    %345 = vmatpush1.bf16.msra.mxu0 0
    %346 = vmatprep.subr.bf16.mxu0 0
    %347 = vmatpush1.bf16.msra.mxu0 0
    %348 = vmatprep.subr.bf16.mxu0 0
    %349 = vmatpush1.bf16.msra.mxu0 0
    %350 = vmatprep.subr.bf16.mxu0 0
    %351 = vmatpush1.bf16.msra.mxu0 0
    %352 = vmatprep.subr.bf16.mxu0 0
    %353 = vmatpush1.bf16.msra.mxu0 0
    %354 = vmatprep.subr.bf16.mxu0 0
    %355 = vmatpush1.bf16.msra.mxu0 0
    %356 = vmatprep.subr.bf16.mxu0 0
    %357 = vmatpush1.bf16.msra.mxu0 0
    %358 = vmatprep.subr.bf16.mxu0 0
    %359 = vmatpush1.bf16.msra.mxu0 0
    %360 = vmatprep.subr.bf16.mxu0 0
    %361 = vmatpush1.bf16.msra.mxu0 0
    %362 = vmatprep.subr.bf16.mxu0 0
    %363 = vmatpush1.bf16.msra.mxu0 0
    %364 = vmatprep.subr.bf16.mxu0 0
    %365 = vmatpush1.bf16.msra.mxu0 0
    %366 = vmatprep.subr.bf16.mxu0 0
    %367 = vmatpush1.bf16.msra.mxu0 0
    %368 = vmatprep.subr.bf16.mxu0 0
    %369 = vmatpush1.bf16.msra.mxu0 0
    %370 = vmatprep.mubr.bf16.mxu0 0
    %371 = vmatmul.mubr.bf16.gmra.mrb[0].mxu0 %v311
    %v372 = vpop.f32.mrb[0].mxu0
    %v373 = vadd.f32 %v192, %v372
    %v374 = vpop.f32.mrb[0].mxu0
    %v375 = vpop.f32.mrb[0].mxu0
    %v376 = vadd.f32 %v197, %v375
    %v377 = vpop.f32.mrb[0].mxu0
    %378 = vmatprep.mubr.bf16.mxu0 0
    %379 = vmatmul.mubr.bf16.gmra.mrb[0].mxu0 %v314
    %v380 = vpop.f32.mrb[0].mxu0
    %v381 = vadd.f32 %v202, %v380
    %v382 = vpop.f32.mrb[0].mxu0
    %v383 = vpop.f32.mrb[0].mxu0
    %v384 = vadd.f32 %v207, %v383
    %v385 = vpop.f32.mrb[0].mxu0
    %386 = vmatprep.mubr.bf16.mxu0 0
    %387 = vmatmul.mubr.bf16.gmra.mrb[0].mxu0 %v317
    %v388 = vpop.f32.mrb[0].mxu0
    %v389 = vadd.f32 %v212, %v388
    %v390 = vpop.f32.mrb[0].mxu0
    %v391 = vpop.f32.mrb[0].mxu0
    %v392 = vadd.f32 %v217, %v391
    %v393 = vpop.f32.mrb[0].mxu0
    %394 = vmatprep.mubr.bf16.mxu0 0
    %395 = vmatmul.mubr.bf16.gmra.mrb[0].mxu0 %v320
    %v396 = vpop.f32.mrb[0].mxu0
    %v397 = vadd.f32 %v222, %v396
    %v398 = vpop.f32.mrb[0].mxu0
    %v399 = vpop.f32.mrb[0].mxu0
    %v400 = vadd.f32 %v227, %v399
    %v401 = vpop.f32.mrb[0].mxu0
    %402 = vmatprep.mubr.bf16.mxu0 0
    %403 = vmatmul.mubr.bf16.gmra.mrb[0].mxu0 %v323
    %v404 = vpop.f32.mrb[0].mxu0
    %v405 = vadd.f32 %v232, %v404
    %v406 = vpop.f32.mrb[0].mxu0
    %v407 = vpop.f32.mrb[0].mxu0
    %v408 = vadd.f32 %v237, %v407
    %v409 = vpop.f32.mrb[0].mxu0
    %410 = vmatprep.mubr.bf16.mxu0 0
    %411 = vmatmul.mubr.bf16.gmra.mrb[0].mxu0 %v326
    %v412 = vpop.f32.mrb[0].mxu0
    %v413 = vadd.f32 %v242, %v412
    %v414 = vpop.f32.mrb[0].mxu0
    %v415 = vpop.f32.mrb[0].mxu0
    %v416 = vadd.f32 %v247, %v415
    %v417 = vpop.f32.mrb[0].mxu0
    %418 = vmatprep.mubr.bf16.mxu0 0
    %419 = vmatmul.mubr.bf16.gmra.mrb[0].mxu0 %v329
    %v420 = vpop.f32.mrb[0].mxu0
    %v421 = vadd.f32 %v252, %v420
    %v422 = vpop.f32.mrb[0].mxu0
    %v423 = vpop.f32.mrb[0].mxu0
    %v424 = vadd.f32 %v257, %v423
    %v425 = vpop.f32.mrb[0].mxu0
    %426 = vmatprep.mubr.bf16.mxu0 0
    %427 = vmatmul.mubr.bf16.gmra.mrb[0].mxu0 %v332
    %v428 = vpop.f32.mrb[0].mxu0
    %v429 = vadd.f32 %v262, %v428
    %v430 = vpop.f32.mrb[0].mxu0
    %v431 = vpop.f32.mrb[0].mxu0
    %v432 = vadd.f32 %v267, %v431
    %v433 = vpop.f32.mrb[0].mxu0
    %434 = vdwg.mxu0
    %v435 = vmax.f32 %v373, 0.0
    %v436 = vmax.f32 %v376, 0.0
    %v437 = vmax.f32 %v381, 0.0
    %v438 = vmax.f32 %v384, 0.0
    %v439 = vmax.f32 %v389, 0.0
    %v440 = vmax.f32 %v392, 0.0
    %v441 = vmax.f32 %v397, 0.0
    %v442 = vmax.f32 %v400, 0.0
    %v443 = vmax.f32 %v405, 0.0
    %v444 = vmax.f32 %v408, 0.0
    %v445 = vmax.f32 %v413, 0.0
    %v446 = vmax.f32 %v416, 0.0
    %v447 = vmax.f32 %v421, 0.0
    %v448 = vmax.f32 %v424, 0.0
    %v449 = vmax.f32 %v429, 0.0
    %v450 = vmax.f32 %v432, 0.0
    %v451 = vld [vmem:[#allocation5] sm:$0xf]
    %v452 = vld [vmem:[#allocation5 + $0x4] sm:$0xf]
    %v453 = vld [vmem:[#allocation5 + $0x8] sm:$0xf]
    %v454 = vld [vmem:[#allocation5 + $0xc] sm:$0xf]
    %v455 = vld [vmem:[#allocation5 + $0x10] sm:$0xf]
    %v456 = vld [vmem:[#allocation5 + $0x14] sm:$0xf]
    %v457 = vld [vmem:[#allocation5 + $0x18] sm:$0xf]
    %v458 = vld [vmem:[#allocation5 + $0x1c] sm:$0xf]
    %v459 = vld [vmem:[#allocation5 + $0x20] sm:$0xf]
    %v460 = vld [vmem:[#allocation5 + $0x24] sm:$0xf]
    %v461 = vld [vmem:[#allocation5 + $0x28] sm:$0xf]
    %v462 = vld [vmem:[#allocation5 + $0x2c] sm:$0xf]
    %v463 = vpack.c.bf16 %v436, %v435
    %v464 = vpack.c.bf16 %v438, %v437
    %v465 = vpack.c.bf16 %v440, %v439
    %v466 = vpack.c.bf16 %v442, %v441
    %v467 = vpack.c.bf16 %v444, %v443
    %v468 = vpack.c.bf16 %v446, %v445
    %v469 = vpack.c.bf16 %v448, %v447
    %v470 = vpack.c.bf16 %v450, %v449
    %v471 = vld [vmem:[#allocation7] sm:$0xff]
    %v472 = vld [vmem:[#allocation7 + $0x8] sm:$0xff]
    %v473 = vld [vmem:[#allocation7 + $0x10] sm:$0xff]
    %v474 = vld [vmem:[#allocation7 + $0x18] sm:$0xff]
    %v475 = vld [vmem:[#allocation7 + $0x20] sm:$0xff]
    %v476 = vld [vmem:[#allocation7 + $0x28] sm:$0xff]
    %v477 = vld [vmem:[#allocation7 + $0x30] sm:$0xff]
    %v478 = vld [vmem:[#allocation7 + $0x38] sm:$0xff]
    %v479 = vld [vmem:[#allocation7 + $0x40] sm:$0xff]
    %v480 = vld [vmem:[#allocation7 + $0x48] sm:$0xff]
    %v481 = vld [vmem:[#allocation7 + $0x50] sm:$0xff]
    %v482 = vld [vmem:[#allocation7 + $0x58] sm:$0xff]
    %484 = vset.pattern.permute.xlu0 0
    %485 = vperm.xlu0 %484, %v471
    %v486 = vpop.permute.xlu0 %485
    %489 = vset.pattern.permute.xlu0 0
    %490 = vperm.xlu0 %489, %v472
    %v491 = vpop.permute.xlu0 %490
    %494 = vset.pattern.permute.xlu0 0
    %495 = vperm.xlu0 %494, %v473
    %v496 = vpop.permute.xlu0 %495
    %499 = vset.pattern.permute.xlu0 0
    %500 = vperm.xlu0 %499, %v474
    %v501 = vpop.permute.xlu0 %500
    %504 = vset.pattern.permute.xlu0 0
    %505 = vperm.xlu0 %504, %v475
    %v506 = vpop.permute.xlu0 %505
    %509 = vset.pattern.permute.xlu0 0
    %510 = vperm.xlu0 %509, %v476
    %v511 = vpop.permute.xlu0 %510
    %514 = vset.pattern.permute.xlu0 0
    %515 = vperm.xlu0 %514, %v477
    %v516 = vpop.permute.xlu0 %515
    %519 = vset.pattern.permute.xlu0 0
    %520 = vperm.xlu0 %519, %v478
    %v521 = vpop.permute.xlu0 %520
    %524 = vset.pattern.permute.xlu0 0
    %525 = vperm.xlu0 %524, %v479
    %v526 = vpop.permute.xlu0 %525
    %529 = vset.pattern.permute.xlu0 0
    %530 = vperm.xlu0 %529, %v480
    %v531 = vpop.permute.xlu0 %530
    %534 = vset.pattern.permute.xlu0 0
    %535 = vperm.xlu0 %534, %v481
    %v536 = vpop.permute.xlu0 %535
    %539 = vset.pattern.permute.xlu0 0
    %540 = vperm.xlu0 %539, %v482
    %v541 = vpop.permute.xlu0 %540
    %v555 = vunpack.c.l.b16 %v451
    %v556 = vunpack.c.l.b16 %v452
    %v557 = vunpack.c.l.b16 %v453
    %v558 = vunpack.c.l.b16 %v454
    %v559 = vunpack.c.l.b16 %v455
    %v560 = vunpack.c.l.b16 %v456
    %v561 = vunpack.c.l.b16 %v457
    %v562 = vunpack.c.l.b16 %v458
    %v563 = vunpack.c.l.b16 %v459
    %v564 = vunpack.c.l.b16 %v460
    %v565 = vunpack.c.l.b16 %v461
    %v566 = vunpack.c.l.b16 %v462
    %v567 = vpack.c.b16 %v556, %v555
    %v568 = vpack.c.b16 %v558, %v557
    %v569 = vpack.c.b16 %v560, %v559
    %v570 = vpack.c.b16 %v562, %v561
    %v571 = vpack.c.b16 %v564, %v563
    %v572 = vpack.c.b16 %v566, %v565
    %579 = vmatprep.subr.bf16.mxu0 0
    %580 = vmatpush1.bf16.msra.mxu0 %v463
    %581 = vmatprep.subr.bf16.mxu0 0
    %582 = vmatpush1.bf16.msra.mxu0 %v464
    %583 = vmatprep.subr.bf16.mxu0 0
    %584 = vmatpush1.bf16.msra.mxu0 %v465
    %585 = vmatprep.subr.bf16.mxu0 0
    %586 = vmatpush1.bf16.msra.mxu0 %v466
    %587 = vmatprep.subr.bf16.mxu0 0
    %588 = vmatpush1.bf16.msra.mxu0 %v467
    %589 = vmatprep.subr.bf16.mxu0 0
    %590 = vmatpush1.bf16.msra.mxu0 %v468
    %591 = vmatprep.subr.bf16.mxu0 0
    %592 = vmatpush1.bf16.msra.mxu0 %v469
    %593 = vmatprep.subr.bf16.mxu0 0
    %594 = vmatpush1.bf16.msra.mxu0 %v470
    %595 = vmatprep.subr.bf16.mxu0 0
    %596 = vmatpush1.bf16.msra.mxu0 0
    %597 = vmatprep.subr.bf16.mxu0 0
    %598 = vmatpush1.bf16.msra.mxu0 0
    %599 = vmatprep.subr.bf16.mxu0 0
    %600 = vmatpush1.bf16.msra.mxu0 0
    %601 = vmatprep.subr.bf16.mxu0 0
    %602 = vmatpush1.bf16.msra.mxu0 0
    %603 = vmatprep.subr.bf16.mxu0 0
    %604 = vmatpush1.bf16.msra.mxu0 0
    %605 = vmatprep.subr.bf16.mxu0 0
    %606 = vmatpush1.bf16.msra.mxu0 0
    %607 = vmatprep.subr.bf16.mxu0 0
    %608 = vmatpush1.bf16.msra.mxu0 0
    %609 = vmatprep.subr.bf16.mxu0 0
    %610 = vmatpush1.bf16.msra.mxu0 0
    %611 = vmatprep.mubr.bf16.mxu0 0
    %612 = vmatmul.mubr.bf16.gmra.mrb[0].mxu0 %v567
    %v613 = vpop.f32.mrb[0].mxu0
    %v614 = vadd.f32 %v486, %v613
    %v615 = vpop.f32.mrb[0].mxu0
    %v616 = vpop.f32.mrb[0].mxu0
    %v617 = vadd.f32 %v491, %v616
    %v618 = vpop.f32.mrb[0].mxu0
    %619 = vmatprep.mubr.bf16.mxu0 0
    %620 = vmatmul.mubr.bf16.gmra.mrb[0].mxu0 %v568
    %v621 = vpop.f32.mrb[0].mxu0
    %v622 = vadd.f32 %v496, %v621
    %v623 = vpop.f32.mrb[0].mxu0
    %v624 = vpop.f32.mrb[0].mxu0
    %v625 = vadd.f32 %v501, %v624
    %v626 = vpop.f32.mrb[0].mxu0
    %627 = vmatprep.mubr.bf16.mxu0 0
    %628 = vmatmul.mubr.bf16.gmra.mrb[0].mxu0 %v569
    %v629 = vpop.f32.mrb[0].mxu0
    %v630 = vadd.f32 %v506, %v629
    %v631 = vpop.f32.mrb[0].mxu0
    %v632 = vpop.f32.mrb[0].mxu0
    %v633 = vadd.f32 %v511, %v632
    %v634 = vpop.f32.mrb[0].mxu0
    %635 = vmatprep.mubr.bf16.mxu0 0
    %636 = vmatmul.mubr.bf16.gmra.mrb[0].mxu0 %v570
    %v637 = vpop.f32.mrb[0].mxu0
    %v638 = vadd.f32 %v516, %v637
    %v639 = vpop.f32.mrb[0].mxu0
    %v640 = vpop.f32.mrb[0].mxu0
    %v641 = vadd.f32 %v521, %v640
    %v642 = vpop.f32.mrb[0].mxu0
    %643 = vmatprep.mubr.bf16.mxu0 0
    %644 = vmatmul.mubr.bf16.gmra.mrb[0].mxu0 %v571
    %v645 = vpop.f32.mrb[0].mxu0
    %v646 = vadd.f32 %v526, %v645
    %v647 = vpop.f32.mrb[0].mxu0
    %v648 = vpop.f32.mrb[0].mxu0
    %v649 = vadd.f32 %v531, %v648
    %v650 = vpop.f32.mrb[0].mxu0
    %651 = vmatprep.mubr.bf16.mxu0 0
    %652 = vmatmul.mubr.bf16.gmra.mrb[0].mxu0 %v572
    %v653 = vpop.f32.mrb[0].mxu0
    %v654 = vadd.f32 %v536, %v653
    %v655 = vpop.f32.mrb[0].mxu0
    %v656 = vpop.f32.mrb[0].mxu0
    %v657 = vadd.f32 %v541, %v656
    %v658 = vpop.f32.mrb[0].mxu0
    %659 = vdwg.mxu0
    %v660 = vmax.f32 %v614, 0.0
    %v661 = vmax.f32 %v617, 0.0
    %v662 = vmax.f32 %v622, 0.0
    %v663 = vmax.f32 %v625, 0.0
    %v664 = vmax.f32 %v630, 0.0
    %v665 = vmax.f32 %v633, 0.0
    %v666 = vmax.f32 %v638, 0.0
    %v667 = vmax.f32 %v641, 0.0
    %v668 = vmax.f32 %v646, 0.0
    %v669 = vmax.f32 %v649, 0.0
    %v670 = vmax.f32 %v654, 0.0
    %v671 = vmax.f32 %v657, 0.0
    %v672 = vld [vmem:[#allocation8] sm:$0xf]
    %v673 = vld [vmem:[#allocation8 + $0x4] sm:$0xf]
    %v674 = vld [vmem:[#allocation8 + $0x8] sm:$0xf]
    %v675 = vld [vmem:[#allocation8 + $0xc] sm:$0xf]
    %v676 = vld [vmem:[#allocation8 + $0x10] sm:$0xf]
    %v677 = vld [vmem:[#allocation8 + $0x14] sm:$0xf]
    %v678 = vld [vmem:[#allocation8 + $0x18] sm:$0xf]
    %v679 = vld [vmem:[#allocation8 + $0x1c] sm:$0xf]
    %v680 = vpack.c.bf16 %v661, %v660
    %v681 = vpack.c.bf16 %v663, %v662
    %v682 = vpack.c.bf16 %v665, %v664
    %v683 = vpack.c.bf16 %v667, %v666
    %v684 = vpack.c.bf16 %v669, %v668
    %v685 = vpack.c.bf16 %v671, %v670
    %v686 = vld [vmem:[#allocation10] sm:$0xff]
    %v687 = vld [vmem:[#allocation10 + $0x8] sm:$0xff]
    %v688 = vld [vmem:[#allocation10 + $0x10] sm:$0xff]
    %v689 = vld [vmem:[#allocation10 + $0x18] sm:$0xff]
    %v690 = vld [vmem:[#allocation10 + $0x20] sm:$0xff]
    %v691 = vld [vmem:[#allocation10 + $0x28] sm:$0xff]
    %v692 = vld [vmem:[#allocation10 + $0x30] sm:$0xff]
    %v693 = vld [vmem:[#allocation10 + $0x38] sm:$0xff]
    %695 = vset.pattern.permute.xlu0 0
    %696 = vperm.xlu0 %695, %v686
    %v697 = vpop.permute.xlu0 %696
    %700 = vset.pattern.permute.xlu0 0
    %701 = vperm.xlu0 %700, %v687
    %v702 = vpop.permute.xlu0 %701
    %705 = vset.pattern.permute.xlu0 0
    %706 = vperm.xlu0 %705, %v688
    %v707 = vpop.permute.xlu0 %706
    %710 = vset.pattern.permute.xlu0 0
    %711 = vperm.xlu0 %710, %v689
    %v712 = vpop.permute.xlu0 %711
    %715 = vset.pattern.permute.xlu0 0
    %716 = vperm.xlu0 %715, %v690
    %v717 = vpop.permute.xlu0 %716
    %720 = vset.pattern.permute.xlu0 0
    %721 = vperm.xlu0 %720, %v691
    %v722 = vpop.permute.xlu0 %721
    %725 = vset.pattern.permute.xlu0 0
    %726 = vperm.xlu0 %725, %v692
    %v727 = vpop.permute.xlu0 %726
    %730 = vset.pattern.permute.xlu0 0
    %731 = vperm.xlu0 %730, %v693
    %v732 = vpop.permute.xlu0 %731
    %v742 = vunpack.c.l.b16 %v672
    %v743 = vunpack.c.l.b16 %v673
    %v744 = vunpack.c.l.b16 %v674
    %v745 = vunpack.c.l.b16 %v675
    %v746 = vunpack.c.l.b16 %v676
    %v747 = vunpack.c.l.b16 %v677
    %v748 = vunpack.c.l.b16 %v678
    %v749 = vunpack.c.l.b16 %v679
    %v750 = vpack.c.b16 %v743, %v742
    %v751 = vpack.c.b16 %v745, %v744
    %v752 = vpack.c.b16 %v747, %v746
    %v753 = vpack.c.b16 %v749, %v748
    %vm754 = vcmask 785408
    %v756 = vsel %vm754, %v750, 0
    %v759 = vsel %vm754, %v751, 0
    %v762 = vsel %vm754, %v752, 0
    %v765 = vsel %vm754, %v753, 0
    %767 = vmatprep.subr.bf16.mxu0 0
    %768 = vmatpush1.bf16.msra.mxu0 %v680
    %769 = vmatprep.subr.bf16.mxu0 0
    %770 = vmatpush1.bf16.msra.mxu0 %v681
    %771 = vmatprep.subr.bf16.mxu0 0
    %772 = vmatpush1.bf16.msra.mxu0 %v682
    %773 = vmatprep.subr.bf16.mxu0 0
    %774 = vmatpush1.bf16.msra.mxu0 %v683
    %775 = vmatprep.subr.bf16.mxu0 0
    %776 = vmatpush1.bf16.msra.mxu0 %v684
    %777 = vmatprep.subr.bf16.mxu0 0
    %778 = vmatpush1.bf16.msra.mxu0 %v685
    %779 = vmatprep.subr.bf16.mxu0 0
    %780 = vmatpush1.bf16.msra.mxu0 0
    %781 = vmatprep.subr.bf16.mxu0 0
    %782 = vmatpush1.bf16.msra.mxu0 0
    %783 = vmatprep.subr.bf16.mxu0 0
    %784 = vmatpush1.bf16.msra.mxu0 0
    %785 = vmatprep.subr.bf16.mxu0 0
    %786 = vmatpush1.bf16.msra.mxu0 0
    %787 = vmatprep.subr.bf16.mxu0 0
    %788 = vmatpush1.bf16.msra.mxu0 0
    %789 = vmatprep.subr.bf16.mxu0 0
    %790 = vmatpush1.bf16.msra.mxu0 0
    %791 = vmatprep.subr.bf16.mxu0 0
    %792 = vmatpush1.bf16.msra.mxu0 0
    %793 = vmatprep.subr.bf16.mxu0 0
    %794 = vmatpush1.bf16.msra.mxu0 0
    %795 = vmatprep.subr.bf16.mxu0 0
    %796 = vmatpush1.bf16.msra.mxu0 0
    %797 = vmatprep.subr.bf16.mxu0 0
    %798 = vmatpush1.bf16.msra.mxu0 0
    %799 = vmatprep.mubr.bf16.mxu0 0
    %800 = vmatmul.mubr.bf16.gmra.mrb[0].mxu0 %v756
    %v801 = vpop.f32.mrb[0].mxu0
    %v802 = vadd.f32 %v697, %v801
    %v803 = vpop.f32.mrb[0].mxu0
    %v804 = vpop.f32.mrb[0].mxu0
    %v805 = vadd.f32 %v702, %v804
    %v806 = vpop.f32.mrb[0].mxu0
    %807 = vmatprep.mubr.bf16.mxu0 0
    %808 = vmatmul.mubr.bf16.gmra.mrb[0].mxu0 %v759
    %v809 = vpop.f32.mrb[0].mxu0
    %v810 = vadd.f32 %v707, %v809
    %v811 = vpop.f32.mrb[0].mxu0
    %v812 = vpop.f32.mrb[0].mxu0
    %v813 = vadd.f32 %v712, %v812
    %v814 = vpop.f32.mrb[0].mxu0
    %815 = vmatprep.mubr.bf16.mxu0 0
    %816 = vmatmul.mubr.bf16.gmra.mrb[0].mxu0 %v762
    %v817 = vpop.f32.mrb[0].mxu0
    %v818 = vadd.f32 %v717, %v817
    %v819 = vpop.f32.mrb[0].mxu0
    %v820 = vpop.f32.mrb[0].mxu0
    %v821 = vadd.f32 %v722, %v820
    %v822 = vpop.f32.mrb[0].mxu0
    %823 = vmatprep.mubr.bf16.mxu0 0
    %824 = vmatmul.mubr.bf16.gmra.mrb[0].mxu0 %v765
    %v825 = vpop.f32.mrb[0].mxu0
    %v826 = vadd.f32 %v727, %v825
    %v827 = vpop.f32.mrb[0].mxu0
    %v828 = vpop.f32.mrb[0].mxu0
    %v829 = vadd.f32 %v732, %v828
    %v830 = vpop.f32.mrb[0].mxu0
    %831 = vdwg.mxu0
    %v832 = vmax.f32 %v802, 0.0
    %v833 = vmax.f32 %v805, 0.0
    %v834 = vmax.f32 %v810, 0.0
    %v835 = vmax.f32 %v813, 0.0
    %v836 = vmax.f32 %v818, 0.0
    %v837 = vmax.f32 %v821, 0.0
    %v838 = vmax.f32 %v826, 0.0
    %v839 = vmax.f32 %v829, 0.0
    %v840 = vld [vmem:[%s7] sm:$0xf]
    %v841 = vld [vmem:[%s7 + $0x4] sm:$0xf]
    %v842 = vld [vmem:[%s7 + $0x8] sm:$0xf]
    %v843 = vld [vmem:[%s7 + $0xc] sm:$0xf]
    %v844 = vpack.c.bf16 %v833, %v832
    %v845 = vpack.c.bf16 %v835, %v834
    %v846 = vpack.c.bf16 %v837, %v836
    %v847 = vpack.c.bf16 %v839, %v838
    %v848 = vld [vmem:[#allocation11] sm:$0xff]
    %v849 = vld [vmem:[#allocation11 + $0x8] sm:$0xff]
    %v850 = vld [vmem:[#allocation11 + $0x10] sm:$0xff]
    %v851 = vld [vmem:[#allocation11 + $0x18] sm:$0xff]
    %853 = vset.pattern.permute.xlu0 0
    %854 = vperm.xlu0 %853, %v848
    %v855 = vpop.permute.xlu0 %854
    %858 = vset.pattern.permute.xlu0 0
    %859 = vperm.xlu0 %858, %v849
    %v860 = vpop.permute.xlu0 %859
    %863 = vset.pattern.permute.xlu0 0
    %864 = vperm.xlu0 %863, %v850
    %v865 = vpop.permute.xlu0 %864
    %868 = vset.pattern.permute.xlu0 0
    %869 = vperm.xlu0 %868, %v851
    %v870 = vpop.permute.xlu0 %869
    %v876 = vunpack.c.l.b16 %v840
    %v877 = vunpack.c.l.b16 %v841
    %v878 = vunpack.c.l.b16 %v842
    %v879 = vunpack.c.l.b16 %v843
    %v880 = vpack.c.b16 %v877, %v876
    %v881 = vpack.c.b16 %v879, %v878
    %vm882 = vcmask 523264
    %v884 = vsel %vm882, %v880, 0
    %v887 = vsel %vm882, %v881, 0
    %889 = vmatprep.subr.bf16.mxu0 0
    %890 = vmatpush1.bf16.msra.mxu0 %v844
    %891 = vmatprep.subr.bf16.mxu0 0
    %892 = vmatpush1.bf16.msra.mxu0 %v845
    %893 = vmatprep.subr.bf16.mxu0 0
    %894 = vmatpush1.bf16.msra.mxu0 %v846
    %895 = vmatprep.subr.bf16.mxu0 0
    %896 = vmatpush1.bf16.msra.mxu0 %v847
    %897 = vmatprep.subr.bf16.mxu0 0
    %898 = vmatpush1.bf16.msra.mxu0 0
    %899 = vmatprep.subr.bf16.mxu0 0
    %900 = vmatpush1.bf16.msra.mxu0 0
    %901 = vmatprep.subr.bf16.mxu0 0
    %902 = vmatpush1.bf16.msra.mxu0 0
    %903 = vmatprep.subr.bf16.mxu0 0
    %904 = vmatpush1.bf16.msra.mxu0 0
    %905 = vmatprep.subr.bf16.mxu0 0
    %906 = vmatpush1.bf16.msra.mxu0 0
    %907 = vmatprep.subr.bf16.mxu0 0
    %908 = vmatpush1.bf16.msra.mxu0 0
    %909 = vmatprep.subr.bf16.mxu0 0
    %910 = vmatpush1.bf16.msra.mxu0 0
    %911 = vmatprep.subr.bf16.mxu0 0
    %912 = vmatpush1.bf16.msra.mxu0 0
    %913 = vmatprep.subr.bf16.mxu0 0
    %914 = vmatpush1.bf16.msra.mxu0 0
    %915 = vmatprep.subr.bf16.mxu0 0
    %916 = vmatpush1.bf16.msra.mxu0 0
    %917 = vmatprep.subr.bf16.mxu0 0
    %918 = vmatpush1.bf16.msra.mxu0 0
    %919 = vmatprep.subr.bf16.mxu0 0
    %920 = vmatpush1.bf16.msra.mxu0 0
    %921 = vmatprep.mubr.bf16.mxu0 0
    %922 = vmatmul.mubr.bf16.gmra.mrb[0].mxu0 %v884
    %v923 = vpop.f32.mrb[0].mxu0
    %v924 = vadd.f32 %v855, %v923
    %v925 = vpop.f32.mrb[0].mxu0
    %v926 = vpop.f32.mrb[0].mxu0
    %v927 = vadd.f32 %v860, %v926
    %v928 = vpop.f32.mrb[0].mxu0
    %929 = vmatprep.mubr.bf16.mxu0 0
    %930 = vmatmul.mubr.bf16.gmra.mrb[0].mxu0 %v887
    %v931 = vpop.f32.mrb[0].mxu0
    %v932 = vadd.f32 %v865, %v931
    %v933 = vpop.f32.mrb[0].mxu0
    %v934 = vpop.f32.mrb[0].mxu0
    %v935 = vadd.f32 %v870, %v934
    %v936 = vpop.f32.mrb[0].mxu0
    %937 = vdwg.mxu0
    %v938 = vmax.f32 %v924, 0.0
    %v939 = vmax.f32 %v927, 0.0
    %v940 = vmax.f32 %v932, 0.0
    %v941 = vmax.f32 %v935, 0.0
    %v942 = vld [vmem:[%s9] sm:$0xf]
    %v943 = vld [vmem:[%s9 + $0x4] sm:$0xf]
    %v944 = vpack.c.bf16 %v939, %v938
    %v945 = vpack.c.bf16 %v941, %v940
    %v946 = vld [vmem:[#allocation13] sm:$0xff]
    %v947 = vld [vmem:[#allocation13 + $0x8] sm:$0xff]
    %949 = vset.pattern.permute.xlu0 0
    %950 = vperm.xlu0 %949, %v946
    %v951 = vpop.permute.xlu0 %950
    %954 = vset.pattern.permute.xlu0 0
    %955 = vperm.xlu0 %954, %v947
    %v956 = vpop.permute.xlu0 %955
    %v960 = vunpack.c.l.b16 %v942
    %v961 = vunpack.c.l.b16 %v943
    %v962 = vpack.c.b16 %v961, %v960
    %vm963 = vcmask 261120
    %v965 = vsel %vm963, %v962, 0
    %967 = vmatprep.subr.bf16.mxu0 0
    %968 = vmatpush1.bf16.msra.mxu0 %v944
    %969 = vmatprep.subr.bf16.mxu0 0
    %970 = vmatpush1.bf16.msra.mxu0 %v945
    %971 = vmatprep.subr.bf16.mxu0 0
    %972 = vmatpush1.bf16.msra.mxu0 0
    %973 = vmatprep.subr.bf16.mxu0 0
    %974 = vmatpush1.bf16.msra.mxu0 0
    %975 = vmatprep.subr.bf16.mxu0 0
    %976 = vmatpush1.bf16.msra.mxu0 0
    %977 = vmatprep.subr.bf16.mxu0 0
    %978 = vmatpush1.bf16.msra.mxu0 0
    %979 = vmatprep.subr.bf16.mxu0 0
    %980 = vmatpush1.bf16.msra.mxu0 0
    %981 = vmatprep.subr.bf16.mxu0 0
    %982 = vmatpush1.bf16.msra.mxu0 0
    %983 = vmatprep.subr.bf16.mxu0 0
    %984 = vmatpush1.bf16.msra.mxu0 0
    %985 = vmatprep.subr.bf16.mxu0 0
    %986 = vmatpush1.bf16.msra.mxu0 0
    %987 = vmatprep.subr.bf16.mxu0 0
    %988 = vmatpush1.bf16.msra.mxu0 0
    %989 = vmatprep.subr.bf16.mxu0 0
    %990 = vmatpush1.bf16.msra.mxu0 0
    %991 = vmatprep.subr.bf16.mxu0 0
    %992 = vmatpush1.bf16.msra.mxu0 0
    %993 = vmatprep.subr.bf16.mxu0 0
    %994 = vmatpush1.bf16.msra.mxu0 0
    %995 = vmatprep.subr.bf16.mxu0 0
    %996 = vmatpush1.bf16.msra.mxu0 0
    %997 = vmatprep.subr.bf16.mxu0 0
    %998 = vmatpush1.bf16.msra.mxu0 0
    %999 = vmatprep.mubr.bf16.mxu0 0
    %1000 = vmatmul.mubr.bf16.gmra.mrb[0].mxu0 %v965
    %v1001 = vpop.f32.mrb[0].mxu0
    %v1002 = vadd.f32 %v951, %v1001
    %v1003 = vpop.f32.mrb[0].mxu0
    %v1004 = vpop.f32.mrb[0].mxu0
    %v1005 = vadd.f32 %v956, %v1004
    %v1006 = vpop.f32.mrb[0].mxu0
    %1007 = vdwg.mxu0
    %v1008 = vmax.f32 %v1002, 0.0
    %v1009 = vmax.f32 %v1005, 0.0
    %v1010 = vld [vmem:[#allocation14] sm:$0xff]
    %v1011 = vld [vmem:[#allocation14 + $0x8] sm:$0xff]
    %1013 = vset.pattern.permute.xlu0 0
    %1014 = vperm.xlu0 %1013, %v1010
    %v1015 = vpop.permute.xlu0 %1014
    %1018 = vset.pattern.permute.xlu0 0
    %1019 = vperm.xlu0 %1018, %v1011
    %v1020 = vpop.permute.xlu0 %1019
    %v1022 = vmul.f32 %v1015, %v1008
    %v1023 = vmul.f32 %v1020, %v1009
    %v1024 = vadd.f32 %v1022, %v1023
    %v1025 = vrot.slane %v1024, 4
    %v1026 = vadd.f32 %v1024, %v1025
    %v1027 = vrot.slane %v1026, 2
    %v1028 = vadd.f32 %v1026, %v1027
    %v1029 = vrot.slane %v1028, 1
    %v1030 = vadd.f32 %v1028, %v1029
    %v1031 = vld [vmem:[#allocation2] sm:$0x1]
    %1033 = vset.pattern.permute.xlu0 0
    %1034 = vperm.xlu0 %1033, %v1031
    %v1035 = vpop.permute.xlu0 %1034
    %v1037 = vlaneseq
    %v1038 = vshrl.u32 %v1037, 7
    %v1039 = vsub.s32 0, %v1038
    %v1040 = vrot.slane %v1035, %v1039
    %v1041 = vadd.f32 %v1030, %v1040
    %v1042 = vxor.u32 %v1041, 2147483648
    %v1043 = vmul.f32 %v1042, 1.442695
    %v1044 = vpow.pop %v1043
    %v1045 = vadd.f32 %v1044, 1.0
    %v1046 = vrcp.pop %v1045
    %v1047 = vmul.f32 1.0, %v1046
    %1048 = vst [vmem:[%s13] sm:$0x1] %v1047
    // Predicated region
    $region86: #{race_predictor_forward.1} parent=1 // pred_check
      _
    $region87: #{race_predictor_forward.1} parent=1 // pred_check_branch
      %1050 = sbr.rel (0) target = $region89
    $region88: #{race_predictor_forward.1} parent=1 // pred_region
      _
    $region89: #{race_predictor_forward.1} parent=1 // pred_fallthru
      _
    // Predicated region
    $region90: #{race_predictor_forward.1} parent=1 // pred_check
      _
    $region91: #{race_predictor_forward.1} parent=1 // pred_check_branch
      %1052 = sbr.rel (0) target = $region93
    $region92: #{race_predictor_forward.1} parent=1 // pred_region
      _
    $region93: #{race_predictor_forward.1} parent=1 // pred_fallthru
      _
    %1053 = vsyncpa [#allocation4], 1
    %1054 = vsyncpa [#allocation6], 1
    %1055 = vsyncpa [#allocation9], 1
    %1056 = vsyncpa [#allocation12], 1
    %1057 = vsyncpa [#allocation15], 1

</llo_original>
